<compile_context>
chip_gen: v7x
topology: tpu7x:2x2x1
jax: 0.10.0
libtpu: 0.0.40
codegen_flags: <defaults>
</compile_context>

<pallas_src>
import functools

import jax
import jax.numpy as jnp
from jax.experimental import pallas as pl
from jax.experimental.pallas import tpu as pltpu

EPS = 1e-5


def ffunit_kernel(x_ref, w_ref, gamma_ref, beta_ref, bits_ref, o_ref,
                  *, dropout_p: float, training: bool, use_bf16_matmul: bool):
    # ---- Linear (MXU) ----
    x = x_ref[...]
    w = w_ref[...]
    if use_bf16_matmul:
        # bf16 inputs + f32 accumulation hit the MXU's native rate at
        # production sizes; irrelevant (and numerics-changing) at demo shape.
        y = jnp.dot(x.astype(jnp.bfloat16), w.astype(jnp.bfloat16),
                    preferred_element_type=jnp.float32)
    else:
        y = jnp.dot(x, w, preferred_element_type=jnp.float32)

    # (Linear bias intentionally omitted: it cancels under training-mode BN.)

    # ---- BatchNorm1d (training), folded into one per-feature scale/shift ----
    mean = jnp.mean(y, axis=0, keepdims=True)                     # [1, TN]
    var = jnp.mean(jnp.square(y - mean), axis=0, keepdims=True)   # [1, TN]
    scale = gamma_ref[...] * jax.lax.rsqrt(var + EPS)             # rsqrt -> EUP (free slot)
    shift = beta_ref[...] - mean * scale                          # [1, TN] vectors only
    y = y * scale + shift                                         # single pass over [B, TN]

    # ---- ReLU + Dropout fused into one select ----
    if training and dropout_p > 0.0:
        thresh = jnp.uint32(min(int(round(dropout_p * 2.0 ** 32)), 2 ** 32 - 1))
        keep = bits_ref[...] >= thresh                            # P(keep) = 1 - p
        inv_keep = jnp.float32(1.0 / (1.0 - dropout_p))
        y = jnp.where(keep & (y > 0.0), y * inv_keep, 0.0)
    else:
        y = jnp.maximum(y, 0.0)

    o_ref[...] = y.astype(o_ref.dtype)


def ffunit_forward(x, w_t, gamma, beta, dropout_bits, *,
                   dropout_p: float = 0.1, training: bool = True,
                   block_n: int = 128, use_bf16_matmul: bool = False):
    """x: [B, F_in] f32, w_t: [F_in, F_out] f32, gamma/beta: [1, F_out] f32,
    dropout_bits: [B, F_out] uint32 (uniform random bits)."""
    B, f_in = x.shape
    f_out = w_t.shape[1]
    tn = min(block_n, f_out)
    assert f_out % tn == 0 and tn % 128 == 0, "feature tile must be lane-dense"
    grid = (f_out // tn,)

    kernel = functools.partial(
        ffunit_kernel, dropout_p=dropout_p, training=training,
        use_bf16_matmul=use_bf16_matmul)

    return pl.pallas_call(
        kernel,
        out_shape=jax.ShapeDtypeStruct((B, f_out), jnp.float32),
        grid=grid,
        in_specs=[
            pl.BlockSpec((B, f_in), lambda j: (0, 0)),    # x: resident across feature tiles
            pl.BlockSpec((f_in, tn), lambda j: (0, j)),   # W^T tile
            pl.BlockSpec((1, tn), lambda j: (0, j)),      # gamma tile
            pl.BlockSpec((1, tn), lambda j: (0, j)),      # beta tile
            pl.BlockSpec((B, tn), lambda j: (0, j)),      # dropout bits tile (unique per block)
        ],
        out_specs=pl.BlockSpec((B, tn), lambda j: (0, j)),
        compiler_params=pltpu.CompilerParams(
            dimension_semantics=("parallel",)),           # megacore-shard on v7x
    )(x, w_t, gamma, beta, dropout_bits)


if __name__ == "__main__":
    B, F_IN, F_OUT = 8, 32, 256  # small, but F_OUT=256 with TN=128 exercises the grid

    key = jax.random.PRNGKey(0)
    kx, kw, kd = jax.random.split(key, 3)

    x = jax.random.normal(kx, (B, F_IN), dtype=jnp.float32)

    # nn.Linear weight: kaiming_normal_(mode='fan_in', nonlinearity='relu') => std = sqrt(2/fan_in)
    w = jax.random.normal(kw, (F_OUT, F_IN), dtype=jnp.float32) * (2.0 / F_IN) ** 0.5
    w_t = jnp.transpose(w)                               # [F_in, F_out]
    # (nn.Linear bias exists in the module but cancels under training-mode BatchNorm.)

    # BatchNorm1d affine defaults
    gamma = jnp.ones((1, F_OUT), jnp.float32)
    beta = jnp.zeros((1, F_OUT), jnp.float32)

    # Uniform u32 bits for dropout, generated host-side (works on TPU and in interpret mode).
    dropout_bits = jax.random.bits(kd, (B, F_OUT), dtype=jnp.uint32)

    out = ffunit_forward(x, w_t, gamma, beta, dropout_bits,
                         dropout_p=0.1, training=True)
    jax.block_until_ready(out)
    assert out.shape == (B, F_OUT) and out.dtype == jnp.float32
    print("KERNEL_OK")
</pallas_src>

<mosaic_0001>
module attributes {stable_mosaic.version = 11 : i64} {
  func.func @ffunit_kernel(%arg0: i32, %arg1: memref<8x32xf32, #tpu.memory_space<vmem>>, %arg2: memref<32x128xf32, #tpu.memory_space<vmem>>, %arg3: memref<1x128xf32, #tpu.memory_space<vmem>>, %arg4: memref<1x128xf32, #tpu.memory_space<vmem>>, %arg5: memref<8x128xi32, #tpu.memory_space<vmem>>, %arg6: memref<8x128xf32, #tpu.memory_space<vmem>>) attributes {dimension_semantics = [#tpu.dimension_semantics<parallel>], iteration_bounds = array<i64: 2>, scalar_prefetch = 0 : i64, scratch_operands = 0 : i64, tpu.core_type = #tpu.core_type<tc>, window_params = [{pipeline_mode = #tpu.pipeline_mode<synchronous>, transform_indices = @transform_0, window_bounds = array<i64: 8, 32>}, {transform_indices = @transform_1, window_bounds = array<i64: 32, 128>}, {transform_indices = @transform_2, window_bounds = array<i64: 1, 128>}, {transform_indices = @transform_3, window_bounds = array<i64: 1, 128>}, {transform_indices = @transform_4, window_bounds = array<i64: 8, 128>}, {transform_indices = @transform_5, window_bounds = array<i64: 8, 128>}]} {
    %c0 = arith.constant 0 : index
    %c0_0 = arith.constant 0 : index
    %0 = vector.load %arg1[%c0, %c0_0] : memref<8x32xf32, #tpu.memory_space<vmem>>, vector<8x32xf32>
    %c0_1 = arith.constant 0 : index
    %c0_2 = arith.constant 0 : index
    %1 = vector.load %arg2[%c0_1, %c0_2] : memref<32x128xf32, #tpu.memory_space<vmem>>, vector<32x128xf32>
    %cst = arith.constant dense<0.000000e+00> : vector<8x128xf32>
    %2 = tpu.matmul %0, %1, %cst {dimension_numbers = #tpu.dot_dimension_numbers<[1], [0], [0], [1], [0, 0, 1, 1], [], []>} : vector<8x32xf32>, vector<32x128xf32>, vector<8x128xf32> -> vector<8x128xf32>
    %cst_3 = arith.constant dense<0.000000e+00> : vector<128xf32>
    %3 = vector.multi_reduction <add>, %2, %cst_3 [0] : vector<8x128xf32> to vector<128xf32>
    %4 = vector.shape_cast %3 : vector<128xf32> to vector<1x128xf32>
    %cst_4 = arith.constant 8.000000e+00 : f32
    %5 = vector.broadcast %cst_4 : f32 to vector<1x128xf32>
    %6 = arith.divf %4, %5 : vector<1x128xf32>
    %7 = vector.broadcast %6 : vector<1x128xf32> to vector<8x128xf32>
    %8 = arith.subf %2, %7 : vector<8x128xf32>
    %9 = arith.mulf %8, %8 : vector<8x128xf32>
    %cst_5 = arith.constant dense<0.000000e+00> : vector<128xf32>
    %10 = vector.multi_reduction <add>, %9, %cst_5 [0] : vector<8x128xf32> to vector<128xf32>
    %11 = vector.shape_cast %10 : vector<128xf32> to vector<1x128xf32>
    %cst_6 = arith.constant 8.000000e+00 : f32
    %12 = vector.broadcast %cst_6 : f32 to vector<1x128xf32>
    %13 = arith.divf %11, %12 : vector<1x128xf32>
    %c0_7 = arith.constant 0 : index
    %c0_8 = arith.constant 0 : index
    %14 = vector.load %arg3[%c0_7, %c0_8] : memref<1x128xf32, #tpu.memory_space<vmem>>, vector<1x128xf32>
    %cst_9 = arith.constant 9.99999974E-6 : f32
    %15 = vector.broadcast %cst_9 : f32 to vector<1x128xf32>
    %16 = arith.addf %13, %15 : vector<1x128xf32>
    %17 = math.rsqrt %16 : vector<1x128xf32>
    %18 = arith.mulf %14, %17 : vector<1x128xf32>
    %c0_10 = arith.constant 0 : index
    %c0_11 = arith.constant 0 : index
    %19 = vector.load %arg4[%c0_10, %c0_11] : memref<1x128xf32, #tpu.memory_space<vmem>>, vector<1x128xf32>
    %20 = arith.mulf %6, %18 : vector<1x128xf32>
    %21 = arith.subf %19, %20 : vector<1x128xf32>
    %22 = vector.broadcast %18 : vector<1x128xf32> to vector<8x128xf32>
    %23 = arith.mulf %2, %22 : vector<8x128xf32>
    %24 = vector.broadcast %21 : vector<1x128xf32> to vector<8x128xf32>
    %25 = arith.addf %23, %24 : vector<8x128xf32>
    %c0_12 = arith.constant 0 : index
    %c0_13 = arith.constant 0 : index
    %26 = vector.load %arg5[%c0_12, %c0_13] : memref<8x128xi32, #tpu.memory_space<vmem>>, vector<8x128xi32>
    %c429496730_i32 = arith.constant 429496730 : i32
    %27 = vector.broadcast %c429496730_i32 : i32 to vector<8x128xi32>
    %28 = arith.cmpi uge, %26, %27 : vector<8x128xi32>
    %cst_14 = arith.constant 0.000000e+00 : f32
    %29 = vector.broadcast %cst_14 : f32 to vector<8x128xf32>
    %30 = arith.cmpf ogt, %25, %29 : vector<8x128xf32>
    %31 = arith.andi %28, %30 : vector<8x128xi1>
    %cst_15 = arith.constant 1.11111116 : f32
    %32 = vector.broadcast %cst_15 : f32 to vector<8x128xf32>
    %33 = arith.mulf %25, %32 : vector<8x128xf32>
    %cst_16 = arith.constant 0.000000e+00 : f32
    %34 = vector.broadcast %cst_16 : f32 to vector<8x128xf32>
    %35 = arith.select %31, %33, %34 : vector<8x128xi1>, vector<8x128xf32>
    %c0_17 = arith.constant 0 : index
    %c0_18 = arith.constant 0 : index
    %36 = vector.load %arg6[%c0_17, %c0_18] : memref<8x128xf32, #tpu.memory_space<vmem>>, vector<8x128xf32>
    tpu.vector_store %arg6[%c0_17, %c0_18], %35 {strides = array<i32>} : memref<8x128xf32, #tpu.memory_space<vmem>>, vector<8x128xf32>,
    return
  }
  func.func @transform_0(%arg0: i32) -> (i32, i32) {
    %c0_i32 = arith.constant 0 : i32
    %c0_i32_0 = arith.constant 0 : i32
    %c0_i32_1 = arith.constant 0 : i32
    return %c0_i32, %c0_i32_0 : i32, i32
  }
  func.func @transform_1(%arg0: i32) -> (i32, i32) {
    %c0_i32 = arith.constant 0 : i32
    %c0_i32_0 = arith.constant 0 : i32
    return %c0_i32, %arg0 : i32, i32
  }
  func.func @transform_2(%arg0: i32) -> (i32, i32) {
    %c0_i32 = arith.constant 0 : i32
    %c0_i32_0 = arith.constant 0 : i32
    return %c0_i32, %arg0 : i32, i32
  }
  func.func @transform_3(%arg0: i32) -> (i32, i32) {
    %c0_i32 = arith.constant 0 : i32
    %c0_i32_0 = arith.constant 0 : i32
    return %c0_i32, %arg0 : i32, i32
  }
  func.func @transform_4(%arg0: i32) -> (i32, i32) {
    %c0_i32 = arith.constant 0 : i32
    %c0_i32_0 = arith.constant 0 : i32
    return %c0_i32, %arg0 : i32, i32
  }
  func.func @transform_5(%arg0: i32) -> (i32, i32) {
    %c0_i32 = arith.constant 0 : i32
    %c0_i32_0 = arith.constant 0 : i32
    return %c0_i32, %arg0 : i32, i32
  }
}

</mosaic_0001>

<llo_original>
// kernel: tpu_custom_call.1
$region0: #{tpu_custom_call.1}
  #allocation0 [shape = 'u32[]', space=smem, size = 0x4, offset = 0x4, fixed_abs, tag = 'smem constant byte address 0x4 - core index']
  #allocation1 [shape = 'u32[144,128]{1,0:T(1,128)}', space=vmem, size = 0x12000, scoped, tag = 'internal scratch']
  %s0 = inlined_call_operand.hbm [shape: f32[8,32], index: 0, kind: input, shape index: {}]
  %s1 = inlined_call_operand.hbm [shape: f32[32,256], index: 1, kind: input, shape index: {}]
  %s2 = inlined_call_operand.vmem [shape: f32[1,256], index: 2, kind: input, shape index: {}]
  %s3 = inlined_call_operand.vmem [shape: f32[1,256], index: 3, kind: input, shape index: {}]
  %s4 = inlined_call_operand.hbm [shape: u32[8,256], index: 4, kind: input, shape index: {}]
  %s5 = inlined_call_operand.hbm [shape: f32[8,256], index: 5, kind: output, shape index: {}]
  %s6 = sld [smem:[#allocation0]]
  $region65: #{tpu_custom_call.1} parent=0
    _
  %s8 = ssub.s32 1, %s6
  %s9 = scalar_select 0, %s8, %s6
  $region1: #{tpu_custom_call.1} parent=0
    #allocation2 [shape = 'u8[4096]{0}', space=vmem, size = 0x1000, scoped, tag = 'input window, operand 0, single buffered']
    #allocation3 [shape = 's32[2]{0}', space=sflag, size = 0x8, scoped, tag = 'scoped memory for tpu_custom_call.1']
    #allocation4 [shape = 's32[2]{0}', space=sflag, size = 0x8, scoped, tag = 'scoped memory for tpu_custom_call.1']
    #allocation5 [shape = 'u8[32768]{0}', space=vmem, size = 0x8000, scoped, tag = 'input window, operand 1']
    #allocation6 [shape = 's32[2]{0}', space=sflag, size = 0x8, scoped, tag = 'scoped memory for tpu_custom_call.1']
    #allocation7 [shape = 'u8[8192]{0}', space=vmem, size = 0x2000, scoped, tag = 'input window, operand 4']
    #allocation8 [shape = 'u8[8192]{0}', space=vmem, size = 0x2000, scoped, tag = 'output window, operand 0']
    %10 = vsyncpa [#allocation3], 0
    %11 = vsyncpa [#allocation6], 0
    %s12 = scalar_lea.sflag [#allocation6], 1
    %13 = vsyncpa %s12, 0
    %14 = vsyncpa [#allocation4], 0
    %s15 = scalar_lea.sflag [#allocation4], 1
    %16 = vsyncpa %s15, 0
    loop: start=0, step=1, limit=4
    $region2: #{tpu_custom_call.1} parent=1 // loop_pre_header
      _
    $region3: #{tpu_custom_call.1} parent=1 // loop_header
      %s18 = sphi 0, %s22
      %p19 = scmp.ge.s32.totalorder %s18, 4
      %s26 = sphi 0, %s26
      %s28 = sphi 0, %s26
      %s29 = sphi 0, %s28
      %s43 = sphi 0, %s29
      %s49 = sphi 0, %s51
      %s52 = sphi 0, %s49
      %s53 = sphi 0, %s52
      %s69 = sphi 0, %s53
      %s75 = sphi 0, %s77
      %s78 = sphi 0, %s75
      %s79 = sphi 0, %s78
      %s95 = sphi 0, %s79
      %s101 = sphi 0, %s103
      %s104 = sphi 0, %s101
      %s105 = sphi 0, %s104
      %s121 = sphi 0, %s105
      %s127 = sphi 0, %s129
      %s130 = sphi 0, %s127
      %s131 = sphi 0, %s130
      %s147 = sphi 0, %s131
      %s153 = sphi 0, %s155
      %s156 = sphi 0, %s153
      %s157 = sphi 0, %s156
      %s173 = sphi 0, %s157
    $region4: #{tpu_custom_call.1} parent=1 // loop_header_branch
      %21 = sbr.rel (%p19) target = $region8
    $region5: #{tpu_custom_call.1} parent=1 // loop_body
      %s23 = ssub.s32 %s18, 1
      %s24 = ssub.s32 %s18, 2
      %s25 = sadd.s32 %s18, 1
      %s27 = sadd.s32 %s26, 1
      %p30 = scmp.eq.s32.totalorder %s18, 1
      %p31 = scmp.ne.s32.totalorder %s26, %s28
      %p32 = scmp.eq.s32.totalorder %s18, 0
      %p33 = por %p31, %p32
      %p34 = scmp.ne.s32.totalorder %s26, %s28
      %p35 = scmp.eq.s32.totalorder %s23, 1
      %p36 = por %p34, %p35
      %p37 = scmp.ne.s32.totalorder %s28, %s29
      %p38 = scmp.eq.s32.totalorder %s23, 0
      %p39 = por %p37, %p38
      %p40 = scmp.ne.s32.totalorder %s28, %s29
      %p41 = scmp.eq.s32.totalorder %s24, 1
      %p42 = por %p40, %p41
      %p44 = scmp.ne.s32.totalorder %s29, %s43
      %p45 = scmp.eq.s32.totalorder %s24, 0
      %p46 = por %p44, %p45
      %s47 = ssub.s32 %s18, %s25
      %p48 = scmp.eq.s32.totalorder %s47, 0
      %s50 = sadd.s32 %s49, 1
      %s51 = scalar_select %p48, %s49, %s50
      %p54 = pneg %p48
      %p55 = scmp.eq.s32.totalorder %s18, 1
      %p56 = por %p54, %p55
      %p57 = scmp.ne.s32.totalorder %s49, %s52
      %p58 = scmp.eq.s32.totalorder %s18, 0
      %p59 = por %p57, %p58
      %p60 = scmp.ne.s32.totalorder %s49, %s52
      %p61 = scmp.eq.s32.totalorder %s23, 1
      %p62 = por %p60, %p61
      %p63 = scmp.ne.s32.totalorder %s52, %s53
      %p64 = scmp.eq.s32.totalorder %s23, 0
      %p65 = por %p63, %p64
      %p66 = scmp.ne.s32.totalorder %s52, %s53
      %p67 = scmp.eq.s32.totalorder %s24, 1
      %p68 = por %p66, %p67
      %p70 = scmp.ne.s32.totalorder %s53, %s69
      %p71 = scmp.eq.s32.totalorder %s24, 0
      %p72 = por %p70, %p71
      %s73 = ssub.s32 %s18, %s25
      %p74 = scmp.eq.s32.totalorder %s73, 0
      %s76 = sadd.s32 %s75, 1
      %s77 = scalar_select %p74, %s75, %s76
      %p80 = pneg %p74
      %p81 = scmp.eq.s32.totalorder %s18, 1
      %p82 = por %p80, %p81
      %p83 = scmp.ne.s32.totalorder %s75, %s78
      %p84 = scmp.eq.s32.totalorder %s18, 0
      %p85 = por %p83, %p84
      %p86 = scmp.ne.s32.totalorder %s75, %s78
      %p87 = scmp.eq.s32.totalorder %s23, 1
      %p88 = por %p86, %p87
      %p89 = scmp.ne.s32.totalorder %s78, %s79
      %p90 = scmp.eq.s32.totalorder %s23, 0
      %p91 = por %p89, %p90
      %p92 = scmp.ne.s32.totalorder %s78, %s79
      %p93 = scmp.eq.s32.totalorder %s24, 1
      %p94 = por %p92, %p93
      %p96 = scmp.ne.s32.totalorder %s79, %s95
      %p97 = scmp.eq.s32.totalorder %s24, 0
      %p98 = por %p96, %p97
      %s99 = ssub.s32 %s18, %s25
      %p100 = scmp.eq.s32.totalorder %s99, 0
      %s102 = sadd.s32 %s101, 1
      %s103 = scalar_select %p100, %s101, %s102
      %p106 = pneg %p100
      %p107 = scmp.eq.s32.totalorder %s18, 1
      %p108 = por %p106, %p107
      %p109 = scmp.ne.s32.totalorder %s101, %s104
      %p110 = scmp.eq.s32.totalorder %s18, 0
      %p111 = por %p109, %p110
      %p112 = scmp.ne.s32.totalorder %s101, %s104
      %p113 = scmp.eq.s32.totalorder %s23, 1
      %p114 = por %p112, %p113
      %p115 = scmp.ne.s32.totalorder %s104, %s105
      %p116 = scmp.eq.s32.totalorder %s23, 0
      %p117 = por %p115, %p116
      %p118 = scmp.ne.s32.totalorder %s104, %s105
      %p119 = scmp.eq.s32.totalorder %s24, 1
      %p120 = por %p118, %p119
      %p122 = scmp.ne.s32.totalorder %s105, %s121
      %p123 = scmp.eq.s32.totalorder %s24, 0
      %p124 = por %p122, %p123
      %s125 = ssub.s32 %s18, %s25
      %p126 = scmp.eq.s32.totalorder %s125, 0
      %s128 = sadd.s32 %s127, 1
      %s129 = scalar_select %p126, %s127, %s128
      %p132 = pneg %p126
      %p133 = scmp.eq.s32.totalorder %s18, 1
      %p134 = por %p132, %p133
      %p135 = scmp.ne.s32.totalorder %s127, %s130
      %p136 = scmp.eq.s32.totalorder %s18, 0
      %p137 = por %p135, %p136
      %p138 = scmp.ne.s32.totalorder %s127, %s130
      %p139 = scmp.eq.s32.totalorder %s23, 1
      %p140 = por %p138, %p139
      %p141 = scmp.ne.s32.totalorder %s130, %s131
      %p142 = scmp.eq.s32.totalorder %s23, 0
      %p143 = por %p141, %p142
      %p144 = scmp.ne.s32.totalorder %s130, %s131
      %p145 = scmp.eq.s32.totalorder %s24, 1
      %p146 = por %p144, %p145
      %p148 = scmp.ne.s32.totalorder %s131, %s147
      %p149 = scmp.eq.s32.totalorder %s24, 0
      %p150 = por %p148, %p149
      %s151 = ssub.s32 %s18, %s25
      %p152 = scmp.eq.s32.totalorder %s151, 0
      %s154 = sadd.s32 %s153, 1
      %s155 = scalar_select %p152, %s153, %s154
      %p158 = pneg %p152
      %p159 = scmp.eq.s32.totalorder %s18, 1
      %p160 = por %p158, %p159
      %p161 = scmp.ne.s32.totalorder %s153, %s156
      %p162 = scmp.eq.s32.totalorder %s18, 0
      %p163 = por %p161, %p162
      %p164 = scmp.ne.s32.totalorder %s153, %s156
      %p165 = scmp.eq.s32.totalorder %s23, 1
      %p166 = por %p164, %p165
      %p167 = scmp.ne.s32.totalorder %s156, %s157
      %p168 = scmp.eq.s32.totalorder %s23, 0
      %p169 = por %p167, %p168
      %p170 = scmp.ne.s32.totalorder %s156, %s157
      %p171 = scmp.eq.s32.totalorder %s24, 1
      %p172 = por %p170, %p171
      %p174 = scmp.ne.s32.totalorder %s157, %s173
      %p175 = scmp.eq.s32.totalorder %s24, 0
      %p176 = por %p174, %p175
      %p177 = scmp.le.s32.totalorder 1, %s18
      %p178 = scmp.lt.s32.totalorder %s18, 3
      %p179 = pnand %p177, %p178
      %p180 = pneg %p179
      // Predicated region
      $region9: #{tpu_custom_call.1} parent=5 // pred_check
        _
      $region10: #{tpu_custom_call.1} parent=5 // pred_check_branch
        %182 = sbr.rel (%p179) target = $region12
      $region11: #{tpu_custom_call.1} parent=5 // pred_region
        %s183 = ssub.s32 %s18, 1
        // Predicated region
        $region13: #{tpu_custom_call.1} parent=11 // pred_check
          %p184 = pneg %p39
        $region14: #{tpu_custom_call.1} parent=11 // pred_check_branch
          %186 = sbr.rel (%p184) target = $region16
        $region15: #{tpu_custom_call.1} parent=11 // pred_region
          %s188 = ssub.s32 128, 128
          %189 = vsyncadd [#allocation3], %s188
          %s191 = sshll.u32 [#allocation2], 4
          %s192 = int_to_ptr.vmem [resolvable:$true] %s191
          %194 = dma.hbm_to_vmem [thread:$0]  %s0, 128, %s192, [#allocation3]
        $region16: #{tpu_custom_call.1} parent=11 // pred_fallthru
          _
      $region12: #{tpu_custom_call.1} parent=5 // pred_fallthru
        _
      %p195 = scmp.lt.s32.totalorder %s18, 2
      // Predicated region
      $region17: #{tpu_custom_call.1} parent=5 // pred_check
        %p196 = pneg %p195
      $region18: #{tpu_custom_call.1} parent=5 // pred_check_branch
        %198 = sbr.rel (%p196) target = $region20
      $region19: #{tpu_custom_call.1} parent=5 // pred_region
        // Predicated region
        $region21: #{tpu_custom_call.1} parent=19 // pred_check
          %p199 = pneg %p59
        $region22: #{tpu_custom_call.1} parent=19 // pred_check_branch
          %201 = sbr.rel (%p199) target = $region24
        $region23: #{tpu_custom_call.1} parent=19 // pred_region
          %s202 = sand.u32 %s18, 1
          %s203 = scalar_lea.sflag [#allocation6], %s202
          %s204 = sand.u32 %s49, 1
          %s205 = smul.addr %s204, 32
          %s206 = scalar_lea.vmem [#allocation5], %s205
          %s208 = ssub.s32 512, 512
          %209 = vsyncadd %s203, %s208
          %s210 = smul.addr %s18, 128
          %s211 = scalar_lea.hbm %s1, %s210
          %s212 = sshll.u32 %s206, 4
          %s213 = int_to_ptr.vmem [resolvable:$true] %s212
          %218 = dma.hbm_to_vmem [thread:$0]  %s211, 512, %s213, %s203, 256, 128, 8
        $region24: #{tpu_custom_call.1} parent=19 // pred_fallthru
          _
        // Predicated region
        $region25: #{tpu_custom_call.1} parent=19 // pred_check
          %p219 = pneg %p85
        $region26: #{tpu_custom_call.1} parent=19 // pred_check_branch
          %221 = sbr.rel (%p219) target = $region28
        $region27: #{tpu_custom_call.1} parent=19 // pred_region
          %p222 = scmp.lt.s32.totalorder %s18, 1
          %s223 = scalar_select %p222, %s18, 1
          %s224 = scalar_lea.vmem %s2, %s223
        $region28: #{tpu_custom_call.1} parent=19 // pred_fallthru
          _
        // Predicated region
        $region29: #{tpu_custom_call.1} parent=19 // pred_check
          %p225 = pneg %p111
        $region30: #{tpu_custom_call.1} parent=19 // pred_check_branch
          %227 = sbr.rel (%p225) target = $region32
        $region31: #{tpu_custom_call.1} parent=19 // pred_region
          %p228 = scmp.lt.s32.totalorder %s18, 1
          %s229 = scalar_select %p228, %s18, 1
          %s230 = scalar_lea.vmem %s3, %s229
        $region32: #{tpu_custom_call.1} parent=19 // pred_fallthru
          _
        // Predicated region
        $region33: #{tpu_custom_call.1} parent=19 // pred_check
          %p231 = pneg %p137
        $region34: #{tpu_custom_call.1} parent=19 // pred_check_branch
          %233 = sbr.rel (%p231) target = $region36
        $region35: #{tpu_custom_call.1} parent=19 // pred_region
          %s234 = sand.u32 %s18, 1
          %s235 = scalar_lea.sflag [#allocation6], %s234
          %s236 = sand.u32 %s127, 1
          %s237 = smul.addr %s236, 8
          %s238 = scalar_lea.vmem [#allocation7], %s237
          %s240 = ssub.s32 128, 128
          %241 = vsyncadd %s235, %s240
          %s242 = smul.addr %s18, 128
          %s243 = scalar_lea.hbm %s4, %s242
          %s245 = sshll.u32 %s238, 4
          %s246 = int_to_ptr.vmem [resolvable:$true] %s245
          %248 = dma.hbm_to_vmem [thread:$0]  %s243, 128, %s246, %s235
        $region36: #{tpu_custom_call.1} parent=19 // pred_fallthru
          _
      $region20: #{tpu_custom_call.1} parent=5 // pred_fallthru
        _
      %p249 = scmp.le.s32.totalorder 1, %s18
      %p250 = scmp.lt.s32.totalorder %s18, 3
      %p251 = pnand %p249, %p250
      %p252 = pneg %p251
      // Predicated region
      $region37: #{tpu_custom_call.1} parent=5 // pred_check
        _
      $region38: #{tpu_custom_call.1} parent=5 // pred_check_branch
        %254 = sbr.rel (%p251) target = $region40
      $region39: #{tpu_custom_call.1} parent=5 // pred_region
        %s255 = ssub.s32 %s18, 1
        // Predicated region
        $region41: #{tpu_custom_call.1} parent=39 // pred_check
          %p256 = pneg %p39
        $region42: #{tpu_custom_call.1} parent=39 // pred_check_branch
          %258 = sbr.rel (%p256) target = $region44
        $region43: #{tpu_custom_call.1} parent=39 // pred_region
          %259 = dma.done [#allocation3], 128
        $region44: #{tpu_custom_call.1} parent=39 // pred_fallthru
          _
        %s260 = sand.u32 %s23, 1
        %s261 = scalar_lea.sflag [#allocation6], %s260
        %s262 = sand.u32 %s52, 1
        %s263 = smul.addr %s262, 32
        %s264 = scalar_lea.vmem [#allocation5], %s263
        // Predicated region
        $region45: #{tpu_custom_call.1} parent=39 // pred_check
          %p265 = pneg %p65
        $region46: #{tpu_custom_call.1} parent=39 // pred_check_branch
          %267 = sbr.rel (%p265) target = $region48
        $region47: #{tpu_custom_call.1} parent=39 // pred_region
          %268 = dma.done %s261, 512
        $region48: #{tpu_custom_call.1} parent=39 // pred_fallthru
          _
        %s269 = sand.u32 %s23, 1
        %s270 = scalar_lea.sflag [#allocation6], %s269
        %s271 = sand.u32 %s130, 1
        %s272 = smul.addr %s271, 8
        %s273 = scalar_lea.vmem [#allocation7], %s272
        // Predicated region
        $region49: #{tpu_custom_call.1} parent=39 // pred_check
          %p274 = pneg %p143
        $region50: #{tpu_custom_call.1} parent=39 // pred_check_branch
          %276 = sbr.rel (%p274) target = $region52
        $region51: #{tpu_custom_call.1} parent=39 // pred_region
          %277 = dma.done %s270, 128
        $region52: #{tpu_custom_call.1} parent=39 // pred_fallthru
          _
        %p278 = pneg %p39
        %p279 = pneg %p36
        %s280 = sand.u32 %s23, 1
        %s281 = scalar_lea.sflag [#allocation6], %s280
        %s282 = sand.u32 %s52, 1
        %s283 = smul.addr %s282, 32
        %s284 = scalar_lea.vmem [#allocation5], %s283
        %p285 = pneg %p65
        %p286 = pneg %p62
        %p287 = scmp.lt.s32.totalorder %s23, 1
        %s288 = scalar_select %p287, %s23, 1
        %s289 = scalar_lea.vmem %s2, %s288
        %p290 = pneg %p91
        %p291 = pneg %p88
        %p292 = scmp.lt.s32.totalorder %s23, 1
        %s293 = scalar_select %p292, %s23, 1
        %s294 = scalar_lea.vmem %s3, %s293
        %p295 = pneg %p117
        %p296 = pneg %p114
        %s297 = sand.u32 %s23, 1
        %s298 = scalar_lea.sflag [#allocation6], %s297
        %s299 = sand.u32 %s130, 1
        %s300 = smul.addr %s299, 8
        %s301 = scalar_lea.vmem [#allocation7], %s300
        %p302 = pneg %p143
        %p303 = pneg %p140
        %p304 = pneg %p169
        %p305 = pneg %p166
        %s306 = sand.u32 %s156, 1
        %s307 = scalar_lea.sflag [#allocation4], %s306
        %s308 = sand.u32 %s156, 1
        %s309 = smul.addr %s308, 8
        %s310 = scalar_lea.vmem [#allocation8], %s309
        %p311 = scmp.lt.s32.totalorder %s23, 1
        %s312 = scalar_select %p311, %s23, 1
        %s313 = scalar_lea.vmem %s2, %s312
        %p314 = scmp.lt.s32.totalorder %s23, 1
        %s315 = scalar_select %p314, %s23, 1
        %s316 = scalar_lea.vmem %s3, %s315
        %v317 = vld [vmem:[#allocation2] sm:$0xff]
        %v318 = vld [vmem:[%s264] sm:$0xff]
        %v319 = vld [vmem:[%s264 + $0x8] sm:$0xff]
        %v320 = vld [vmem:[%s264 + $0x10] sm:$0xff]
        %v321 = vld [vmem:[%s264 + $0x18] sm:$0xff]
        %vm322 = vcmask 261120
        %v324 = vsel %vm322, %v317, 0
        %326 = vmatprep.subr.mxu0 0.0
        %327 = vmatpush1.msra.mxu0 %v318
        %328 = vmatprep.subr.mxu0 0.0
        %329 = vmatpush1.msra.mxu0 %v319
        %330 = vmatprep.subr.mxu0 0.0
        %331 = vmatpush1.msra.mxu0 %v320
        %332 = vmatprep.subr.mxu0 0.0
        %333 = vmatpush1.msra.mxu0 %v321
        %334 = vmatprep.subr.mxu0 0.0
        %335 = vmatpush1.msra.mxu0 0.0
        %336 = vmatprep.subr.mxu0 0.0
        %337 = vmatpush1.msra.mxu0 0.0
        %338 = vmatprep.subr.mxu0 0.0
        %339 = vmatpush1.msra.mxu0 0.0
        %340 = vmatprep.subr.mxu0 0.0
        %341 = vmatpush1.msra.mxu0 0.0
        %342 = vmatprep.subr.mxu0 0.0
        %343 = vmatpush1.msra.mxu0 0.0
        %344 = vmatprep.subr.mxu0 0.0
        %345 = vmatpush1.msra.mxu0 0.0
        %346 = vmatprep.subr.mxu0 0.0
        %347 = vmatpush1.msra.mxu0 0.0
        %348 = vmatprep.subr.mxu0 0.0
        %349 = vmatpush1.msra.mxu0 0.0
        %350 = vmatprep.subr.mxu0 0.0
        %351 = vmatpush1.msra.mxu0 0.0
        %352 = vmatprep.subr.mxu0 0.0
        %353 = vmatpush1.msra.mxu0 0.0
        %354 = vmatprep.subr.mxu0 0.0
        %355 = vmatpush1.msra.mxu0 0.0
        %356 = vmatprep.subr.mxu0 0.0
        %357 = vmatpush1.msra.mxu0 0.0
        %358 = vmatprep.subr.mxu0 0.0
        %359 = vmatpush1.msra.mxu0 0.0
        %360 = vmatprep.subr.mxu0 0.0
        %361 = vmatpush1.msra.mxu0 0.0
        %362 = vmatprep.subr.mxu0 0.0
        %363 = vmatpush1.msra.mxu0 0.0
        %364 = vmatprep.subr.mxu0 0.0
        %365 = vmatpush1.msra.mxu0 0.0
        %366 = vmatprep.subr.mxu0 0.0
        %367 = vmatpush1.msra.mxu0 0.0
        %368 = vmatprep.subr.mxu0 0.0
        %369 = vmatpush1.msra.mxu0 0.0
        %370 = vmatprep.subr.mxu0 0.0
        %371 = vmatpush1.msra.mxu0 0.0
        %372 = vmatprep.subr.mxu0 0.0
        %373 = vmatpush1.msra.mxu0 0.0
        %374 = vmatprep.subr.mxu0 0.0
        %375 = vmatpush1.msra.mxu0 0.0
        %376 = vmatprep.subr.mxu0 0.0
        %377 = vmatpush1.msra.mxu0 0.0
        %378 = vmatprep.subr.mxu0 0.0
        %379 = vmatpush1.msra.mxu0 0.0
        %380 = vmatprep.subr.mxu0 0.0
        %381 = vmatpush1.msra.mxu0 0.0
        %382 = vmatprep.subr.mxu0 0.0
        %383 = vmatpush1.msra.mxu0 0.0
        %384 = vmatprep.subr.mxu0 0.0
        %385 = vmatpush1.msra.mxu0 0.0
        %386 = vmatprep.subr.mxu0 0.0
        %387 = vmatpush1.msra.mxu0 0.0
        %388 = vmatprep.subr.mxu0 0.0
        %389 = vmatpush1.msra.mxu0 0.0
        %390 = vmatprep.mubr.f32.mxu0 0.0
        %391 = vmatmul.mubr.f32.gmra.mrb[0].mxu0 %v324
        %v392 = vpop.f32.mrb[0].mxu0
        %v393 = vadd.f32 0.0, %v392
        %v394 = vpop.f32.mrb[0].mxu0
        %395 = vdwg.mxu0
        %v396 = vrot.slane %v393, 4
        %v397 = vadd.f32 %v393, %v396
        %v398 = vrot.slane %v397, 2
        %v399 = vadd.f32 %v397, %v398
        %v400 = vrot.slane %v399, 1
        %v401 = vadd.f32 %v399, %v400
        %v402 = vrcp.pop 8.0
        %v403 = vmul.f32 %v401, %v402
        %v404 = vsub.f32 %v393, %v403
        %v405 = vmul.f32 %v404, %v404
        %v406 = vrot.slane %v405, 4
        %v407 = vadd.f32 %v405, %v406
        %v408 = vrot.slane %v407, 2
        %v409 = vadd.f32 %v407, %v408
        %v410 = vrot.slane %v409, 1
        %v411 = vadd.f32 %v409, %v410
        %v412 = vmul.f32 %v411, %v402
        %v413 = vld [vmem:[%s313] sm:$0x1]
        %v414 = vadd.f32 %v412, 1e-05
        %v415 = vrsqrt.pop %v414
        %v416 = vmul.f32 %v413, %v415
        %v417 = vld [vmem:[%s316] sm:$0x1]
        %v418 = vmul.f32 %v403, %v416
        %v419 = vsub.f32 %v417, %v418
        %v421 = vlaneseq
        %v422 = vshrl.u32 %v421, 7
        %v423 = vsub.s32 0, %v422
        %v424 = vrot.slane %v416, %v423
        %v426 = vmul.f32 %v393, %v424
        %v428 = vlaneseq
        %v429 = vshrl.u32 %v428, 7
        %v430 = vsub.s32 0, %v429
        %v431 = vrot.slane %v419, %v430
        %v433 = vadd.f32 %v426, %v431
        %v434 = vld [vmem:[%s273] sm:$0xff]
        %vm435 = vcmp.ge.u32.totalorder %v434, 429496730
        %vm436 = vcmp.gt.f32.partialorder %v433, 0.0
        %vm437 = vmand %vm435, %vm436
        %v438 = vmul.f32 %v433, 1.1111112
        %v439 = vsel %vm437, %v438, 0.0
        %440 = vst [vmem:[%s310] sm:$0xff] %v439
        %s441 = sand.u32 %s156, 1
        %s442 = scalar_lea.sflag [#allocation4], %s441
        %s443 = sand.u32 %s156, 1
        %s444 = smul.addr %s443, 8
        %s445 = scalar_lea.vmem [#allocation8], %s444
        // Predicated region
        $region53: #{tpu_custom_call.1} parent=39 // pred_check
          %p446 = pneg %p166
        $region54: #{tpu_custom_call.1} parent=39 // pred_check_branch
          %448 = sbr.rel (%p446) target = $region56
        $region55: #{tpu_custom_call.1} parent=39 // pred_region
          %s450 = ssub.s32 128, 128
          %451 = vsyncadd %s442, %s450
          %s452 = smul.addr %s23, 128
          %s453 = scalar_lea.hbm %s5, %s452
          %s455 = sshll.u32 %s445, 4
          %s456 = int_to_ptr.vmem [resolvable:$true] %s455
          %458 = dma.vmem_to_hbm [thread:$0]  %s456, 128, %s453, %s442
        $region56: #{tpu_custom_call.1} parent=39 // pred_fallthru
          _
      $region40: #{tpu_custom_call.1} parent=5 // pred_fallthru
        _
      %p459 = scmp.le.s32.totalorder 2, %s18
      // Predicated region
      $region57: #{tpu_custom_call.1} parent=5 // pred_check
        %p460 = pneg %p459
      $region58: #{tpu_custom_call.1} parent=5 // pred_check_branch
        %462 = sbr.rel (%p460) target = $region60
      $region59: #{tpu_custom_call.1} parent=5 // pred_region
        %s463 = ssub.s32 %s18, 2
        // Predicated region
        $region61: #{tpu_custom_call.1} parent=59 // pred_check
          %p464 = pneg %p172
        $region62: #{tpu_custom_call.1} parent=59 // pred_check_branch
          %466 = sbr.rel (%p464) target = $region64
        $region63: #{tpu_custom_call.1} parent=59 // pred_region
          %s467 = sand.u32 %s157, 1
          %s468 = scalar_lea.sflag [#allocation4], %s467
          %s469 = sand.u32 %s157, 1
          %s470 = smul.addr %s469, 8
          %s471 = scalar_lea.vmem [#allocation8], %s470
          %472 = dma.done %s468, 128
        $region64: #{tpu_custom_call.1} parent=59 // pred_fallthru
          _
      $region60: #{tpu_custom_call.1} parent=5 // pred_fallthru
        _
    $region6: #{tpu_custom_call.1} parent=1 // loop_footer
      %s22 = sadd.s32 1, %s18
    $region7: #{tpu_custom_call.1} parent=1 // loop_footer_branch
      %17 = sbr.rel target = $region3
    $region8: #{tpu_custom_call.1} parent=1 // loop_exit
      _
    %473 = vsyncpa [#allocation3], 1
    %s474 = scalar_lea.sflag [#allocation3], 1
    %475 = vsyncpa %s474, 1
    %476 = vsyncpa [#allocation6], 1
    %s477 = scalar_lea.sflag [#allocation6], 1
    %478 = vsyncpa %s477, 1
    %479 = vsyncpa [#allocation4], 1
    %s480 = scalar_lea.sflag [#allocation4], 1
    %481 = vsyncpa %s480, 1

</llo_original>
